<compile_context>
chip_gen: v7x
topology: tpu7x:2x2x1
jax: 0.10.0
libtpu: 0.0.40
codegen_flags: <defaults>
</compile_context>

<pallas_src>
import functools

import jax
import jax.numpy as jnp
from jax.experimental import pallas as pl
from jax.experimental.pallas import tpu as pltpu


def _mlp_kernel(xT_ref, w1t_ref, b1_ref, w2t_ref, b2_ref, o_ref):
    # xT_ref:  [27, TILE_B]   (features on sublanes, batch on lanes)
    # w1t_ref: [27, 27]       (out_features, in_features)
    # b1_ref:  [27, 1]
    # w2t_ref: [ 9, 27]
    # b2_ref:  [ 9, 1]
    # o_ref:   [ 9, TILE_B]
    h = jnp.dot(w1t_ref[...], xT_ref[...], preferred_element_type=jnp.float32)
    h = jnp.maximum(h + b1_ref[...], 0.0)           # bias broadcasts along lanes
    y = jnp.dot(w2t_ref[...], h, preferred_element_type=jnp.float32)
    o_ref[...] = (y + b2_ref[...]).astype(o_ref.dtype)


def _round_up(n, m):
    return ((n + m - 1) // m) * m


@functools.partial(jax.jit, static_argnames=("tile_b",))
def player_forward(x, w1, b1, w2, b2, *, tile_b=4096):
    """x: [B, 27]; w1: [27, 27] (in,out); b1: [27]; w2: [27, 9] (in,out); b2: [9] -> [B, 9]"""
    B, in_f = x.shape
    out_f = w2.shape[1]

    # Tile size: lane-aligned (multiple of 128), large to amortize per-step grid
    # overhead, but no larger than the (128-aligned) batch itself.
    tb = min(tile_b, _round_up(B, 128))
    B_pad = _round_up(B, tb)
    grid = (B_pad // tb,)

    # Wrapper-side layout plumbing (kept out of the kernel):
    #   pad batch, put batch on the lane axis, weights as [out, in].
    x_p = jnp.pad(x, ((0, B_pad - B), (0, 0)))
    xT = x_p.T                       # [27, B_pad]
    w1t = w1.T                       # [27, 27]  (out, in)
    w2t = w2.T                       # [ 9, 27]  (out, in)
    b1c = b1.reshape(in_f, 1)        # [27, 1]
    b2c = b2.reshape(out_f, 1)       # [ 9, 1]

    bytes_per = jnp.dtype(x.dtype).itemsize
    cost = pl.CostEstimate(
        flops=2 * B_pad * (in_f * in_f + in_f * out_f),
        transcendentals=0,
        bytes_accessed=bytes_per * (B_pad * (in_f + out_f)
                                    + in_f * in_f + in_f
                                    + in_f * out_f + out_f),
    )

    yT = pl.pallas_call(
        _mlp_kernel,
        out_shape=jax.ShapeDtypeStruct((out_f, B_pad), x.dtype),
        grid=grid,
        in_specs=[
            pl.BlockSpec((in_f, tb), lambda i: (0, i)),        # x tile (pipelined)
            pl.BlockSpec((in_f, in_f), lambda i: (0, 0)),      # W1ᵀ (resident)
            pl.BlockSpec((in_f, 1), lambda i: (0, 0)),         # b1
            pl.BlockSpec((out_f, in_f), lambda i: (0, 0)),     # W2ᵀ (resident)
            pl.BlockSpec((out_f, 1), lambda i: (0, 0)),        # b2
        ],
        out_specs=pl.BlockSpec((out_f, tb), lambda i: (0, i)), # lane-dense output
        compiler_params=pltpu.CompilerParams(
            dimension_semantics=("parallel",),                 # v7x: shard batch across TCs
        ),
        cost_estimate=cost,
    )(xT, w1t, b1c, w2t, b2c)

    # Transpose back to the PyTorch-facing [B, 9] layout and drop the batch pad.
    return yT[:, :B].T


def init_params(key):
    """Deterministic init mimicking PyTorch nn.Linear default (U[-1/sqrt(fan_in), 1/sqrt(fan_in)])."""
    input_size, fc1_size, fc2_size = 27, 27, 9
    k1, k2, k3, k4 = jax.random.split(key, 4)
    bound1 = 1.0 / jnp.sqrt(jnp.float32(input_size))
    bound2 = 1.0 / jnp.sqrt(jnp.float32(fc1_size))
    # Stored as [in, out] (transposed relative to PyTorch's [out, in]).
    w1 = jax.random.uniform(k1, (input_size, fc1_size), jnp.float32, -bound1, bound1)
    b1 = jax.random.uniform(k2, (fc1_size,), jnp.float32, -bound1, bound1)
    w2 = jax.random.uniform(k3, (fc1_size, fc2_size), jnp.float32, -bound2, bound2)
    b2 = jax.random.uniform(k4, (fc2_size,), jnp.float32, -bound2, bound2)
    return w1, b1, w2, b2


if __name__ == "__main__":
    key = jax.random.PRNGKey(0)
    k_params, k_x, k_x2 = jax.random.split(key, 3)
    w1, b1, w2, b2 = init_params(k_params)

    # Small batch (pads internally to one lane-aligned tile).
    B = 8
    x = jax.random.normal(k_x, (B, 27), jnp.float32)
    out = jax.block_until_ready(player_forward(x, w1, b1, w2, b2))
    ref = jnp.maximum(x @ w1 + b1, 0.0) @ w2 + b2
    assert out.shape == (B, 9)
    assert jnp.allclose(out, ref, atol=1e-5, rtol=1e-5)

    # Larger, non-tile-multiple batch exercises the multi-step pipelined grid + tail pad.
    B2 = 4096 + 300
    x2 = jax.random.normal(k_x2, (B2, 27), jnp.float32)
    out2 = jax.block_until_ready(player_forward(x2, w1, b1, w2, b2, tile_b=1024))
    ref2 = jnp.maximum(x2 @ w1 + b1, 0.0) @ w2 + b2
    assert out2.shape == (B2, 9)
    assert jnp.allclose(out2, ref2, atol=1e-5, rtol=1e-5)

    print("KERNEL_OK")
</pallas_src>

<mosaic_0001>
module attributes {stable_mosaic.version = 11 : i64} {
  func.func @_mlp_kernel(%arg0: i32, %arg1: memref<27x128xf32, #tpu.memory_space<vmem>>, %arg2: memref<27x27xf32, #tpu.memory_space<vmem>>, %arg3: memref<27x1xf32, #tpu.memory_space<vmem>>, %arg4: memref<9x27xf32, #tpu.memory_space<vmem>>, %arg5: memref<9x1xf32, #tpu.memory_space<vmem>>, %arg6: memref<9x128xf32, #tpu.memory_space<vmem>>) attributes {dimension_semantics = [#tpu.dimension_semantics<parallel>], iteration_bounds = array<i64: 1>, scalar_prefetch = 0 : i64, scratch_operands = 0 : i64, tpu.core_type = #tpu.core_type<tc>, window_params = [{transform_indices = @transform_0, window_bounds = array<i64: 27, 128>}, {pipeline_mode = #tpu.pipeline_mode<synchronous>, transform_indices = @transform_1, window_bounds = array<i64: 27, 27>}, {pipeline_mode = #tpu.pipeline_mode<synchronous>, transform_indices = @transform_2, window_bounds = array<i64: 27, 1>}, {pipeline_mode = #tpu.pipeline_mode<synchronous>, transform_indices = @transform_3, window_bounds = array<i64: 9, 27>}, {pipeline_mode = #tpu.pipeline_mode<synchronous>, transform_indices = @transform_4, window_bounds = array<i64: 9, 1>}, {transform_indices = @transform_5, window_bounds = array<i64: 9, 128>}]} {
    %c0 = arith.constant 0 : index
    %c0_0 = arith.constant 0 : index
    %0 = vector.load %arg2[%c0, %c0_0] : memref<27x27xf32, #tpu.memory_space<vmem>>, vector<27x27xf32>
    %c0_1 = arith.constant 0 : index
    %c0_2 = arith.constant 0 : index
    %1 = vector.load %arg1[%c0_1, %c0_2] : memref<27x128xf32, #tpu.memory_space<vmem>>, vector<27x128xf32>
    %cst = arith.constant dense<0.000000e+00> : vector<27x128xf32>
    %2 = tpu.matmul %0, %1, %cst {dimension_numbers = #tpu.dot_dimension_numbers<[1], [0], [0], [1], [0, 0, 1, 1], [], []>} : vector<27x27xf32>, vector<27x128xf32>, vector<27x128xf32> -> vector<27x128xf32>
    %c0_3 = arith.constant 0 : index
    %c0_4 = arith.constant 0 : index
    %3 = vector.load %arg3[%c0_3, %c0_4] : memref<27x1xf32, #tpu.memory_space<vmem>>, vector<27x1xf32>
    %4 = vector.broadcast %3 : vector<27x1xf32> to vector<27x128xf32>
    %5 = arith.addf %2, %4 : vector<27x128xf32>
    %cst_5 = arith.constant 0.000000e+00 : f32
    %6 = vector.broadcast %cst_5 : f32 to vector<27x128xf32>
    %7 = arith.maximumf %5, %6 : vector<27x128xf32>
    %c0_6 = arith.constant 0 : index
    %c0_7 = arith.constant 0 : index
    %8 = vector.load %arg4[%c0_6, %c0_7] : memref<9x27xf32, #tpu.memory_space<vmem>>, vector<9x27xf32>
    %cst_8 = arith.constant dense<0.000000e+00> : vector<9x128xf32>
    %9 = tpu.matmul %8, %7, %cst_8 {dimension_numbers = #tpu.dot_dimension_numbers<[1], [0], [0], [1], [0, 0, 1, 1], [], []>} : vector<9x27xf32>, vector<27x128xf32>, vector<9x128xf32> -> vector<9x128xf32>
    %c0_9 = arith.constant 0 : index
    %c0_10 = arith.constant 0 : index
    %10 = vector.load %arg5[%c0_9, %c0_10] : memref<9x1xf32, #tpu.memory_space<vmem>>, vector<9x1xf32>
    %11 = vector.broadcast %10 : vector<9x1xf32> to vector<9x128xf32>
    %12 = arith.addf %9, %11 : vector<9x128xf32>
    %c0_11 = arith.constant 0 : index
    %c0_12 = arith.constant 0 : index
    %13 = vector.load %arg6[%c0_11, %c0_12] : memref<9x128xf32, #tpu.memory_space<vmem>>, vector<9x128xf32>
    tpu.vector_store %arg6[%c0_11, %c0_12], %12 {strides = array<i32>} : memref<9x128xf32, #tpu.memory_space<vmem>>, vector<9x128xf32>,
    return
  }
  func.func @transform_0(%arg0: i32) -> (i32, i32) {
    %c0_i32 = arith.constant 0 : i32
    %c0_i32_0 = arith.constant 0 : i32
    return %c0_i32, %arg0 : i32, i32
  }
  func.func @transform_1(%arg0: i32) -> (i32, i32) {
    %c0_i32 = arith.constant 0 : i32
    %c0_i32_0 = arith.constant 0 : i32
    %c0_i32_1 = arith.constant 0 : i32
    return %c0_i32, %c0_i32_0 : i32, i32
  }
  func.func @transform_2(%arg0: i32) -> (i32, i32) {
    %c0_i32 = arith.constant 0 : i32
    %c0_i32_0 = arith.constant 0 : i32
    %c0_i32_1 = arith.constant 0 : i32
    return %c0_i32, %c0_i32_0 : i32, i32
  }
  func.func @transform_3(%arg0: i32) -> (i32, i32) {
    %c0_i32 = arith.constant 0 : i32
    %c0_i32_0 = arith.constant 0 : i32
    %c0_i32_1 = arith.constant 0 : i32
    return %c0_i32, %c0_i32_0 : i32, i32
  }
  func.func @transform_4(%arg0: i32) -> (i32, i32) {
    %c0_i32 = arith.constant 0 : i32
    %c0_i32_0 = arith.constant 0 : i32
    %c0_i32_1 = arith.constant 0 : i32
    return %c0_i32, %c0_i32_0 : i32, i32
  }
  func.func @transform_5(%arg0: i32) -> (i32, i32) {
    %c0_i32 = arith.constant 0 : i32
    %c0_i32_0 = arith.constant 0 : i32
    return %c0_i32, %arg0 : i32, i32
  }
}

</mosaic_0001>

<llo_original>
// kernel: player_forward.1
$region0: #{player_forward.1}
  #allocation0 [shape = 'u32[]', space=smem, size = 0x4, offset = 0x4, fixed_abs, tag = 'smem constant byte address 0x4 - core index']
  #allocation1 [shape = 'u32[144,128]{1,0:T(1,128)}', space=vmem, size = 0x12000, scoped, tag = 'internal scratch']
  %s0 = inlined_call_operand.vmem [shape: f32[27,128], index: 0, kind: input, shape index: {}]
  %s1 = inlined_call_operand.vmem [shape: f32[27,27], index: 1, kind: input, shape index: {}]
  %s2 = inlined_call_operand.vmem [shape: f32[27,1], index: 2, kind: input, shape index: {}]
  %s3 = inlined_call_operand.vmem [shape: f32[9,27], index: 3, kind: input, shape index: {}]
  %s4 = inlined_call_operand.vmem [shape: f32[9,1], index: 4, kind: input, shape index: {}]
  %s5 = inlined_call_operand.vmem [shape: f32[9,128], index: 5, kind: output, shape index: {}]
  %s6 = sld [smem:[#allocation0]]
  $region30: #{player_forward.1} parent=0
    _
  %s8 = ssub.s32 1, %s6
  %s9 = scalar_select 0, %s8, %s6
  // Predicated region
  $region2: #{player_forward.1} parent=0 // pred_check
    _
  $region3: #{player_forward.1} parent=0 // pred_check_branch
    %11 = sbr.rel (0) target = $region5
  $region4: #{player_forward.1} parent=0 // pred_region
    _
  $region5: #{player_forward.1} parent=0 // pred_fallthru
    _
  // Predicated region
  $region6: #{player_forward.1} parent=0 // pred_check
    _
  $region7: #{player_forward.1} parent=0 // pred_check_branch
    %13 = sbr.rel (0) target = $region9
  $region8: #{player_forward.1} parent=0 // pred_region
    _
  $region9: #{player_forward.1} parent=0 // pred_fallthru
    _
  // Predicated region
  $region10: #{player_forward.1} parent=0 // pred_check
    _
  $region11: #{player_forward.1} parent=0 // pred_check_branch
    %15 = sbr.rel (0) target = $region13
  $region12: #{player_forward.1} parent=0 // pred_region
    _
  $region13: #{player_forward.1} parent=0 // pred_fallthru
    _
  // Predicated region
  $region14: #{player_forward.1} parent=0 // pred_check
    _
  $region15: #{player_forward.1} parent=0 // pred_check_branch
    %17 = sbr.rel (0) target = $region17
  $region16: #{player_forward.1} parent=0 // pred_region
    _
  $region17: #{player_forward.1} parent=0 // pred_fallthru
    _
  // Predicated region
  $region18: #{player_forward.1} parent=0 // pred_check
    _
  $region19: #{player_forward.1} parent=0 // pred_check_branch
    %19 = sbr.rel (0) target = $region21
  $region20: #{player_forward.1} parent=0 // pred_region
    _
  $region21: #{player_forward.1} parent=0 // pred_fallthru
    _
  %v20 = vld [vmem:[%s1] sm:$0xff]
  %v21 = vld [vmem:[%s1 + $0x8] sm:$0xff]
  %v22 = vld [vmem:[%s1 + $0x10] sm:$0xff]
  %v23 = vld [vmem:[%s1 + $0x18] sm:$0x7]
  %v24 = vld [vmem:[%s0] sm:$0xff]
  %v25 = vld [vmem:[%s0 + $0x8] sm:$0xff]
  %v26 = vld [vmem:[%s0 + $0x10] sm:$0xff]
  %v27 = vld [vmem:[%s0 + $0x18] sm:$0x7]
  %v28 = vld [vmem:[%s2] sm:$0xff]
  %v29 = vld [vmem:[%s2 + $0x8] sm:$0xff]
  %v30 = vld [vmem:[%s2 + $0x10] sm:$0xff]
  %v31 = vld [vmem:[%s2 + $0x18] sm:$0x7]
  %33 = vset.pattern.permute.xlu0 0
  %34 = vperm.xlu0 %33, %v28
  %v35 = vpop.permute.xlu0 %34
  %38 = vset.pattern.permute.xlu0 0
  %39 = vperm.xlu0 %38, %v29
  %v40 = vpop.permute.xlu0 %39
  %43 = vset.pattern.permute.xlu0 0
  %44 = vperm.xlu0 %43, %v30
  %v45 = vpop.permute.xlu0 %44
  %48 = vset.pattern.permute.xlu0 0
  %49 = vperm.xlu0 %48, %v31
  %v50 = vpop.permute.xlu0 %49
  %vm52 = vcmask 220160
  %v54 = vsel %vm52, %v20, 0
  %v57 = vsel %vm52, %v21, 0
  %v60 = vsel %vm52, %v22, 0
  %v63 = vsel %vm52, %v23, 0
  %vm65 = vcmask 1042432
  %v67 = vsel %vm65, %v27, 0
  %69 = vmatprep.subr.mxu0 0.0
  %70 = vmatpush1.msra.mxu0 %v24
  %71 = vmatprep.subr.mxu0 0.0
  %72 = vmatpush1.msra.mxu0 %v25
  %73 = vmatprep.subr.mxu0 0.0
  %74 = vmatpush1.msra.mxu0 %v26
  %75 = vmatprep.subr.mxu0 0.0
  %76 = vmatpush1.msra.mxu0 %v67
  %77 = vmatprep.subr.mxu0 0.0
  %78 = vmatpush1.msra.mxu0 0.0
  %79 = vmatprep.subr.mxu0 0.0
  %80 = vmatpush1.msra.mxu0 0.0
  %81 = vmatprep.subr.mxu0 0.0
  %82 = vmatpush1.msra.mxu0 0.0
  %83 = vmatprep.subr.mxu0 0.0
  %84 = vmatpush1.msra.mxu0 0.0
  %85 = vmatprep.subr.mxu0 0.0
  %86 = vmatpush1.msra.mxu0 0.0
  %87 = vmatprep.subr.mxu0 0.0
  %88 = vmatpush1.msra.mxu0 0.0
  %89 = vmatprep.subr.mxu0 0.0
  %90 = vmatpush1.msra.mxu0 0.0
  %91 = vmatprep.subr.mxu0 0.0
  %92 = vmatpush1.msra.mxu0 0.0
  %93 = vmatprep.subr.mxu0 0.0
  %94 = vmatpush1.msra.mxu0 0.0
  %95 = vmatprep.subr.mxu0 0.0
  %96 = vmatpush1.msra.mxu0 0.0
  %97 = vmatprep.subr.mxu0 0.0
  %98 = vmatpush1.msra.mxu0 0.0
  %99 = vmatprep.subr.mxu0 0.0
  %100 = vmatpush1.msra.mxu0 0.0
  %101 = vmatprep.subr.mxu0 0.0
  %102 = vmatpush1.msra.mxu0 0.0
  %103 = vmatprep.subr.mxu0 0.0
  %104 = vmatpush1.msra.mxu0 0.0
  %105 = vmatprep.subr.mxu0 0.0
  %106 = vmatpush1.msra.mxu0 0.0
  %107 = vmatprep.subr.mxu0 0.0
  %108 = vmatpush1.msra.mxu0 0.0
  %109 = vmatprep.subr.mxu0 0.0
  %110 = vmatpush1.msra.mxu0 0.0
  %111 = vmatprep.subr.mxu0 0.0
  %112 = vmatpush1.msra.mxu0 0.0
  %113 = vmatprep.subr.mxu0 0.0
  %114 = vmatpush1.msra.mxu0 0.0
  %115 = vmatprep.subr.mxu0 0.0
  %116 = vmatpush1.msra.mxu0 0.0
  %117 = vmatprep.subr.mxu0 0.0
  %118 = vmatpush1.msra.mxu0 0.0
  %119 = vmatprep.subr.mxu0 0.0
  %120 = vmatpush1.msra.mxu0 0.0
  %121 = vmatprep.subr.mxu0 0.0
  %122 = vmatpush1.msra.mxu0 0.0
  %123 = vmatprep.subr.mxu0 0.0
  %124 = vmatpush1.msra.mxu0 0.0
  %125 = vmatprep.subr.mxu0 0.0
  %126 = vmatpush1.msra.mxu0 0.0
  %127 = vmatprep.subr.mxu0 0.0
  %128 = vmatpush1.msra.mxu0 0.0
  %129 = vmatprep.subr.mxu0 0.0
  %130 = vmatpush1.msra.mxu0 0.0
  %131 = vmatprep.subr.mxu0 0.0
  %132 = vmatpush1.msra.mxu0 0.0
  %133 = vmatprep.mubr.f32.mxu0 0.0
  %134 = vmatmul.mubr.f32.gmra.mrb[0].mxu0 %v54
  %v135 = vpop.f32.mrb[0].mxu0
  %v136 = vadd.f32 %v35, %v135
  %v137 = vpop.f32.mrb[0].mxu0
  %138 = vmatprep.mubr.f32.mxu0 0.0
  %139 = vmatmul.mubr.f32.gmra.mrb[0].mxu0 %v57
  %v140 = vpop.f32.mrb[0].mxu0
  %v141 = vadd.f32 %v40, %v140
  %v142 = vpop.f32.mrb[0].mxu0
  %143 = vmatprep.mubr.f32.mxu0 0.0
  %144 = vmatmul.mubr.f32.gmra.mrb[0].mxu0 %v60
  %v145 = vpop.f32.mrb[0].mxu0
  %v146 = vadd.f32 %v45, %v145
  %v147 = vpop.f32.mrb[0].mxu0
  %148 = vmatprep.mubr.f32.mxu0 0.0
  %149 = vmatmul.mubr.f32.gmra.mrb[0].mxu0 %v63
  %v150 = vpop.f32.mrb[0].mxu0
  %v151 = vadd.f32 %v50, %v150
  %v152 = vpop.f32.mrb[0].mxu0
  %153 = vdwg.mxu0
  %v154 = vmax.f32 %v136, 0.0
  %v155 = vmax.f32 %v141, 0.0
  %v156 = vmax.f32 %v146, 0.0
  %v157 = vmax.f32 %v151, 0.0
  %v158 = vld [vmem:[%s3] sm:$0xff]
  %v159 = vld [vmem:[%s3 + $0x8] sm:$0x1]
  %v160 = vld [vmem:[%s4] sm:$0xff]
  %v161 = vld [vmem:[%s4 + $0x8] sm:$0x1]
  %163 = vset.pattern.permute.xlu0 0
  %164 = vperm.xlu0 %163, %v160
  %v165 = vpop.permute.xlu0 %164
  %168 = vset.pattern.permute.xlu0 0
  %169 = vperm.xlu0 %168, %v161
  %v170 = vpop.permute.xlu0 %169
  %v173 = vsel %vm52, %v158, 0
  %v176 = vsel %vm52, %v159, 0
  %v179 = vsel %vm65, %v157, 0
  %181 = vmatprep.subr.mxu0 0.0
  %182 = vmatpush1.msra.mxu0 %v154
  %183 = vmatprep.subr.mxu0 0.0
  %184 = vmatpush1.msra.mxu0 %v155
  %185 = vmatprep.subr.mxu0 0.0
  %186 = vmatpush1.msra.mxu0 %v156
  %187 = vmatprep.subr.mxu0 0.0
  %188 = vmatpush1.msra.mxu0 %v179
  %189 = vmatprep.subr.mxu0 0.0
  %190 = vmatpush1.msra.mxu0 0.0
  %191 = vmatprep.subr.mxu0 0.0
  %192 = vmatpush1.msra.mxu0 0.0
  %193 = vmatprep.subr.mxu0 0.0
  %194 = vmatpush1.msra.mxu0 0.0
  %195 = vmatprep.subr.mxu0 0.0
  %196 = vmatpush1.msra.mxu0 0.0
  %197 = vmatprep.subr.mxu0 0.0
  %198 = vmatpush1.msra.mxu0 0.0
  %199 = vmatprep.subr.mxu0 0.0
  %200 = vmatpush1.msra.mxu0 0.0
  %201 = vmatprep.subr.mxu0 0.0
  %202 = vmatpush1.msra.mxu0 0.0
  %203 = vmatprep.subr.mxu0 0.0
  %204 = vmatpush1.msra.mxu0 0.0
  %205 = vmatprep.subr.mxu0 0.0
  %206 = vmatpush1.msra.mxu0 0.0
  %207 = vmatprep.subr.mxu0 0.0
  %208 = vmatpush1.msra.mxu0 0.0
  %209 = vmatprep.subr.mxu0 0.0
  %210 = vmatpush1.msra.mxu0 0.0
  %211 = vmatprep.subr.mxu0 0.0
  %212 = vmatpush1.msra.mxu0 0.0
  %213 = vmatprep.subr.mxu0 0.0
  %214 = vmatpush1.msra.mxu0 0.0
  %215 = vmatprep.subr.mxu0 0.0
  %216 = vmatpush1.msra.mxu0 0.0
  %217 = vmatprep.subr.mxu0 0.0
  %218 = vmatpush1.msra.mxu0 0.0
  %219 = vmatprep.subr.mxu0 0.0
  %220 = vmatpush1.msra.mxu0 0.0
  %221 = vmatprep.subr.mxu0 0.0
  %222 = vmatpush1.msra.mxu0 0.0
  %223 = vmatprep.subr.mxu0 0.0
  %224 = vmatpush1.msra.mxu0 0.0
  %225 = vmatprep.subr.mxu0 0.0
  %226 = vmatpush1.msra.mxu0 0.0
  %227 = vmatprep.subr.mxu0 0.0
  %228 = vmatpush1.msra.mxu0 0.0
  %229 = vmatprep.subr.mxu0 0.0
  %230 = vmatpush1.msra.mxu0 0.0
  %231 = vmatprep.subr.mxu0 0.0
  %232 = vmatpush1.msra.mxu0 0.0
  %233 = vmatprep.subr.mxu0 0.0
  %234 = vmatpush1.msra.mxu0 0.0
  %235 = vmatprep.subr.mxu0 0.0
  %236 = vmatpush1.msra.mxu0 0.0
  %237 = vmatprep.subr.mxu0 0.0
  %238 = vmatpush1.msra.mxu0 0.0
  %239 = vmatprep.subr.mxu0 0.0
  %240 = vmatpush1.msra.mxu0 0.0
  %241 = vmatprep.subr.mxu0 0.0
  %242 = vmatpush1.msra.mxu0 0.0
  %243 = vmatprep.subr.mxu0 0.0
  %244 = vmatpush1.msra.mxu0 0.0
  %245 = vmatprep.mubr.f32.mxu0 0.0
  %246 = vmatmul.mubr.f32.gmra.mrb[0].mxu0 %v173
  %v247 = vpop.f32.mrb[0].mxu0
  %v248 = vadd.f32 %v165, %v247
  %v249 = vpop.f32.mrb[0].mxu0
  %250 = vmatprep.mubr.f32.mxu0 0.0
  %251 = vmatmul.mubr.f32.gmra.mrb[0].mxu0 %v176
  %v252 = vpop.f32.mrb[0].mxu0
  %v253 = vadd.f32 %v170, %v252
  %v254 = vpop.f32.mrb[0].mxu0
  %255 = vdwg.mxu0
  %256 = vst [vmem:[%s5] sm:$0xff] %v248
  %257 = vst [vmem:[%s5 + $0x8] sm:$0x1] %v253
  // Predicated region
  $region22: #{player_forward.1} parent=0 // pred_check
    _
  $region23: #{player_forward.1} parent=0 // pred_check_branch
    %259 = sbr.rel (0) target = $region25
  $region24: #{player_forward.1} parent=0 // pred_region
    _
  $region25: #{player_forward.1} parent=0 // pred_fallthru
    _
  // Predicated region
  $region26: #{player_forward.1} parent=0 // pred_check
    _
  $region27: #{player_forward.1} parent=0 // pred_check_branch
    %261 = sbr.rel (0) target = $region29
  $region28: #{player_forward.1} parent=0 // pred_region
    _
  $region29: #{player_forward.1} parent=0 // pred_fallthru
    _

</llo_original>
